<compile_context>
chip_gen: v5e
topology: v5e:2x2
jax: 0.10.0
libtpu: 0.0.40
codegen_flags: <defaults>
</compile_context>

<pallas_src>
import functools

import jax
import jax.numpy as jnp
from jax.experimental import pallas as pl
from jax.experimental.pallas import tpu as pltpu

_LANE = 128
_SUBLANE = 8


def _round_up(x, m):
    return (x + m - 1) // m * m


def _mlp_kernel(x_ref, w1_ref, b1_ref, w2_ref, b2_ref, o_ref, *, num_classes):
    # x_ref:  (TM, D_in)      VMEM  (TM multiple of 8, D_in = full feature dim)
    # w1_ref: (D_in, H)       VMEM  (constant block index -> resident)
    # b1_ref: (1, H)          VMEM  f32
    # w2_ref: (H, OUT_PAD)    VMEM  (128-padded class dim, MXU-friendly)
    # b2_ref: (1, OUT_PAD)    VMEM  f32
    # o_ref:  (TM, C)         VMEM  narrow output (C = num_classes)
    x = x_ref[...].astype(w1_ref.dtype)          # in-kernel (optional bf16) cast
    h = jnp.dot(x, w1_ref[...], preferred_element_type=jnp.float32)
    h = jnp.maximum(h + b1_ref[...], 0.0)        # bias + ReLU in f32
    out = jnp.dot(h.astype(w2_ref.dtype), w2_ref[...],
                  preferred_element_type=jnp.float32) + b2_ref[...]
    # Store only the real classes; the 2-lane masked store is trivially cheap
    # and saves the 64x-inflated padded writeback.
    o_ref[...] = out[:, :num_classes].astype(o_ref.dtype)


def prepare_classifier_params(w1, b1, w2, b2, *, use_bf16=False):
    """One-time parameter prep (do this OUTSIDE the per-step hot path).

    Pads the class head to 128 lanes for the MXU, reshapes biases to (1, H),
    and optionally pre-casts the weights to bf16.
    """
    d_in, hidden = w1.shape
    num_classes = w2.shape[1]
    out_pad = _round_up(num_classes, _LANE)

    w_dtype = jnp.bfloat16 if use_bf16 else jnp.float32
    w1p = w1.astype(w_dtype)
    w2p = (jnp.zeros((hidden, out_pad), jnp.float32)
           .at[:, :num_classes].set(w2.astype(jnp.float32))).astype(w_dtype)
    b1r = b1.reshape(1, hidden).astype(jnp.float32)
    b2p = (jnp.zeros((1, out_pad), jnp.float32)
           .at[0, :num_classes].set(b2.astype(jnp.float32)))
    return (w1p, b1r, w2p, b2p, num_classes)


def classifier_forward(x, params, *, block_b=8192, min_grid_steps=1):
    """Forward pass of Classifier: reshape + Linear(128) + ReLU + Linear(C).

    x:      (B, num_timesteps, num_features)
    params: output of prepare_classifier_params
    returns logits: (B, num_classes) float32
    """
    w1p, b1r, w2p, b2p, num_classes = params
    B = x.shape[0]
    x2 = x.reshape(B, -1)                     # row-major, same as torch .reshape
    d_in = x2.shape[1]
    hidden = w1p.shape[1]
    out_pad = w2p.shape[1]
    assert w1p.shape == (d_in, hidden)

    # --- Batch tile: TM multiple of 8, grid = cdiv(B, TM) (ragged last block
    # handled by Pallas; no jnp.pad round trip).  min_grid_steps=2 gives both
    # v7x TensorCores work when B is small enough to otherwise fit one step.
    tm = _round_up(pl.cdiv(B, max(int(min_grid_steps), 1)), _SUBLANE)
    tm = min(tm, _round_up(block_b, _SUBLANE))
    grid = (pl.cdiv(B, tm),)

    itemsize = jnp.dtype(x2.dtype).itemsize
    flops = 2 * B * (d_in * hidden + hidden * out_pad)
    bytes_accessed = (B * d_in * itemsize
                      + w1p.size * w1p.dtype.itemsize
                      + b1r.size * 4
                      + w2p.size * w2p.dtype.itemsize
                      + b2p.size * 4
                      + B * num_classes * 4)

    kernel = functools.partial(_mlp_kernel, num_classes=num_classes)

    out = pl.pallas_call(
        kernel,
        out_shape=jax.ShapeDtypeStruct((B, num_classes), jnp.float32),
        grid_spec=pltpu.PrefetchScalarGridSpec(
            num_scalar_prefetch=0,
            grid=grid,
            in_specs=[
                pl.BlockSpec((tm, d_in), lambda i: (i, 0)),         # x tile / step
                pl.BlockSpec((d_in, hidden), lambda i: (0, 0)),     # W1 resident
                pl.BlockSpec((1, hidden), lambda i: (0, 0)),        # b1 resident
                pl.BlockSpec((hidden, out_pad), lambda i: (0, 0)),  # W2 resident
                pl.BlockSpec((1, out_pad), lambda i: (0, 0)),       # b2 resident
            ],
            out_specs=pl.BlockSpec((tm, num_classes), lambda i: (i, 0)),
        ),
        compiler_params=pltpu.CompilerParams(
            dimension_semantics=("parallel",)),                     # megacore on v7x
        cost_estimate=pl.CostEstimate(
            flops=flops, transcendentals=0, bytes_accessed=bytes_accessed),
    )(x2, w1p, b1r, w2p, b2p)

    return out


def init_classifier_params(key, num_features, num_timesteps=1,
                           include_action=False, num_actions=3, hidden=128,
                           num_classes=2):
    """Deterministic init matching nn.Linear's default (Uniform(-1/sqrt(fan_in), ...)).

    Weights are stored as (in, out) for the kernel (torch stores (out, in))."""
    d_in = num_timesteps * num_features + (num_actions if include_action else 0)
    k1, k2, k3, k4 = jax.random.split(key, 4)
    bound1 = 1.0 / jnp.sqrt(d_in)
    bound2 = 1.0 / jnp.sqrt(hidden)
    w1 = jax.random.uniform(k1, (d_in, hidden), jnp.float32, -bound1, bound1)
    b1 = jax.random.uniform(k2, (hidden,), jnp.float32, -bound1, bound1)
    w2 = jax.random.uniform(k3, (hidden, num_classes), jnp.float32, -bound2, bound2)
    b2 = jax.random.uniform(k4, (num_classes,), jnp.float32, -bound2, bound2)
    return w1, b1, w2, b2


if __name__ == "__main__":
    key = jax.random.PRNGKey(0)

    # env_name='can' -> num_features=23, num_timesteps=1, include_action=False
    num_features = 23
    num_timesteps = 1
    batch = 48

    kx, kp = jax.random.split(key)
    x = jax.random.normal(kx, (batch, num_timesteps, num_features), jnp.float32)
    w1, b1, w2, b2 = init_classifier_params(kp, num_features, num_timesteps)

    x2 = x.reshape(batch, -1)
    ref = jnp.maximum(x2 @ w1 + b1, 0.0) @ w2 + b2

    # f32 path, single grid step (default): exact match vs. plain-JAX reference.
    params_f32 = prepare_classifier_params(w1, b1, w2, b2, use_bf16=False)
    logits = classifier_forward(x, params_f32)
    jax.block_until_ready(logits)
    assert logits.shape == (batch, 2)
    assert jnp.allclose(logits, ref, atol=1e-5, rtol=1e-5)

    # f32 path, two grid steps (v7x-style megacore split).
    logits2 = classifier_forward(x, params_f32, min_grid_steps=2)
    jax.block_until_ready(logits2)
    assert jnp.allclose(logits2, ref, atol=1e-5, rtol=1e-5)

    # f32 path, multi-step grid with a ragged last block (no batch padding).
    x_ragged = jax.random.normal(kx, (50, num_timesteps, num_features), jnp.float32)
    ref_ragged = (jnp.maximum(x_ragged.reshape(50, -1) @ w1 + b1, 0.0) @ w2 + b2)
    logits_r = classifier_forward(x_ragged, params_f32, block_b=16)
    jax.block_until_ready(logits_r)
    assert logits_r.shape == (50, 2)
    assert jnp.allclose(logits_r, ref_ragged, atol=1e-5, rtol=1e-5)

    # bf16 MXU-input path (weights pre-cast once; x cast in-kernel; f32 accum).
    params_bf16 = prepare_classifier_params(w1, b1, w2, b2, use_bf16=True)
    logits_bf16 = classifier_forward(x, params_bf16)
    jax.block_until_ready(logits_bf16)
    assert logits_bf16.shape == (batch, 2)
    assert jnp.allclose(logits_bf16, ref, atol=1e-1, rtol=1e-1)

    print("KERNEL_OK")
</pallas_src>

<mosaic_0001>
module attributes {stable_mosaic.version = 11 : i64} {
  func.func @_mlp_kernel(%arg0: i32, %arg1: memref<48x23xf32, #tpu.memory_space<vmem>>, %arg2: memref<23x128xf32, #tpu.memory_space<vmem>>, %arg3: memref<1x128xf32, #tpu.memory_space<vmem>>, %arg4: memref<128x128xf32, #tpu.memory_space<vmem>>, %arg5: memref<1x128xf32, #tpu.memory_space<vmem>>, %arg6: memref<48x2xf32, #tpu.memory_space<vmem>>) attributes {dimension_semantics = [#tpu.dimension_semantics<parallel>], iteration_bounds = array<i64: 1>, scalar_prefetch = 0 : i64, scratch_operands = 0 : i64, tpu.core_type = #tpu.core_type<tc>, window_params = [{transform_indices = @transform_0, window_bounds = array<i64: 48, 23>}, {pipeline_mode = #tpu.pipeline_mode<synchronous>, transform_indices = @transform_1, window_bounds = array<i64: 23, 128>}, {pipeline_mode = #tpu.pipeline_mode<synchronous>, transform_indices = @transform_2, window_bounds = array<i64: 1, 128>}, {pipeline_mode = #tpu.pipeline_mode<synchronous>, transform_indices = @transform_3, window_bounds = array<i64: 128, 128>}, {pipeline_mode = #tpu.pipeline_mode<synchronous>, transform_indices = @transform_4, window_bounds = array<i64: 1, 128>}, {transform_indices = @transform_5, window_bounds = array<i64: 48, 2>}]} {
    %c0 = arith.constant 0 : index
    %c0_0 = arith.constant 0 : index
    %0 = vector.load %arg1[%c0, %c0_0] : memref<48x23xf32, #tpu.memory_space<vmem>>, vector<48x23xf32>
    %c0_1 = arith.constant 0 : index
    %c0_2 = arith.constant 0 : index
    %1 = vector.load %arg2[%c0_1, %c0_2] : memref<23x128xf32, #tpu.memory_space<vmem>>, vector<23x128xf32>
    %cst = arith.constant dense<0.000000e+00> : vector<48x128xf32>
    %2 = tpu.matmul %0, %1, %cst {dimension_numbers = #tpu.dot_dimension_numbers<[1], [0], [0], [1], [0, 0, 1, 1], [], []>} : vector<48x23xf32>, vector<23x128xf32>, vector<48x128xf32> -> vector<48x128xf32>
    %c0_3 = arith.constant 0 : index
    %c0_4 = arith.constant 0 : index
    %3 = vector.load %arg3[%c0_3, %c0_4] : memref<1x128xf32, #tpu.memory_space<vmem>>, vector<1x128xf32>
    %4 = vector.broadcast %3 : vector<1x128xf32> to vector<48x128xf32>
    %5 = arith.addf %2, %4 : vector<48x128xf32>
    %cst_5 = arith.constant 0.000000e+00 : f32
    %6 = vector.broadcast %cst_5 : f32 to vector<48x128xf32>
    %7 = arith.maximumf %5, %6 : vector<48x128xf32>
    %c0_6 = arith.constant 0 : index
    %c0_7 = arith.constant 0 : index
    %8 = vector.load %arg4[%c0_6, %c0_7] : memref<128x128xf32, #tpu.memory_space<vmem>>, vector<128x128xf32>
    %cst_8 = arith.constant dense<0.000000e+00> : vector<48x128xf32>
    %9 = tpu.matmul %7, %8, %cst_8 {dimension_numbers = #tpu.dot_dimension_numbers<[1], [0], [0], [1], [0, 0, 1, 1], [], []>} : vector<48x128xf32>, vector<128x128xf32>, vector<48x128xf32> -> vector<48x128xf32>
    %c0_9 = arith.constant 0 : index
    %c0_10 = arith.constant 0 : index
    %10 = vector.load %arg5[%c0_9, %c0_10] : memref<1x128xf32, #tpu.memory_space<vmem>>, vector<1x128xf32>
    %11 = vector.broadcast %10 : vector<1x128xf32> to vector<48x128xf32>
    %12 = arith.addf %9, %11 : vector<48x128xf32>
    %13 = vector.extract_strided_slice %12 {offsets = [0, 0], sizes = [48, 2], strides = [1, 1]} : vector<48x128xf32> to vector<48x2xf32>
    %c0_11 = arith.constant 0 : index
    %c0_12 = arith.constant 0 : index
    %14 = vector.load %arg6[%c0_11, %c0_12] : memref<48x2xf32, #tpu.memory_space<vmem>>, vector<48x2xf32>
    tpu.vector_store %arg6[%c0_11, %c0_12], %13 {strides = array<i32>} : memref<48x2xf32, #tpu.memory_space<vmem>>, vector<48x2xf32>,
    return
  }
  func.func @transform_0(%arg0: i32) -> (i32, i32) {
    %c0_i32 = arith.constant 0 : i32
    %c0_i32_0 = arith.constant 0 : i32
    return %arg0, %c0_i32 : i32, i32
  }
  func.func @transform_1(%arg0: i32) -> (i32, i32) {
    %c0_i32 = arith.constant 0 : i32
    %c0_i32_0 = arith.constant 0 : i32
    %c0_i32_1 = arith.constant 0 : i32
    return %c0_i32, %c0_i32_0 : i32, i32
  }
  func.func @transform_2(%arg0: i32) -> (i32, i32) {
    %c0_i32 = arith.constant 0 : i32
    %c0_i32_0 = arith.constant 0 : i32
    %c0_i32_1 = arith.constant 0 : i32
    return %c0_i32, %c0_i32_0 : i32, i32
  }
  func.func @transform_3(%arg0: i32) -> (i32, i32) {
    %c0_i32 = arith.constant 0 : i32
    %c0_i32_0 = arith.constant 0 : i32
    %c0_i32_1 = arith.constant 0 : i32
    return %c0_i32, %c0_i32_0 : i32, i32
  }
  func.func @transform_4(%arg0: i32) -> (i32, i32) {
    %c0_i32 = arith.constant 0 : i32
    %c0_i32_0 = arith.constant 0 : i32
    %c0_i32_1 = arith.constant 0 : i32
    return %c0_i32, %c0_i32_0 : i32, i32
  }
  func.func @transform_5(%arg0: i32) -> (i32, i32) {
    %c0_i32 = arith.constant 0 : i32
    %c0_i32_0 = arith.constant 0 : i32
    return %arg0, %c0_i32 : i32, i32
  }
}

</mosaic_0001>

<llo_original>
// kernel: tpu_custom_call.1
$region0: #{tpu_custom_call.1}
  #allocation0 [shape = 'u32[]', space=smem, size = 0x4, offset = 0x4, fixed_abs, tag = 'smem constant byte address 0x4 - core index']
  #allocation1 [shape = 'u32[72,128]{1,0:T(1,128)}', space=vmem, size = 0x9000, scoped, tag = 'internal scratch']
  %s0 = inlined_call_operand.vmem [shape: f32[48,23], index: 0, kind: input, shape index: {}]
  %s1 = inlined_call_operand.vmem [shape: f32[23,128], index: 1, kind: input, shape index: {}]
  %s2 = inlined_call_operand.vmem [shape: f32[1,128], index: 2, kind: input, shape index: {}]
  %s3 = inlined_call_operand.hbm [shape: f32[128,128], index: 3, kind: input, shape index: {}]
  %s4 = inlined_call_operand.vmem [shape: f32[1,128], index: 4, kind: input, shape index: {}]
  %s5 = inlined_call_operand.vmem [shape: f32[48,2], index: 5, kind: output, shape index: {}]
  %s6 = sld [smem:[#allocation0]]
  $region34: #{tpu_custom_call.1} parent=0
    _
  %s8 = ssub.s32 1, %s6
  %s9 = scalar_select 0, %s8, %s6
  $region1: #{tpu_custom_call.1} parent=0
    #allocation2 [shape = 'u8[65536]{0}', space=vmem, size = 0x10000, scoped, tag = 'input window, operand 3, single buffered']
    #allocation3 [shape = 's32[1]{0}', space=sflag, size = 0x4, scoped, tag = 'scoped memory for tpu_custom_call.1']
    %10 = vsyncpa [#allocation3], 0
    // Predicated region
    $region2: #{tpu_custom_call.1} parent=1 // pred_check
      _
    $region3: #{tpu_custom_call.1} parent=1 // pred_check_branch
      %12 = sbr.rel (0) target = $region5
    $region4: #{tpu_custom_call.1} parent=1 // pred_region
      _
    $region5: #{tpu_custom_call.1} parent=1 // pred_fallthru
      _
    // Predicated region
    $region6: #{tpu_custom_call.1} parent=1 // pred_check
      _
    $region7: #{tpu_custom_call.1} parent=1 // pred_check_branch
      %14 = sbr.rel (0) target = $region9
    $region8: #{tpu_custom_call.1} parent=1 // pred_region
      _
    $region9: #{tpu_custom_call.1} parent=1 // pred_fallthru
      _
    // Predicated region
    $region10: #{tpu_custom_call.1} parent=1 // pred_check
      _
    $region11: #{tpu_custom_call.1} parent=1 // pred_check_branch
      %16 = sbr.rel (0) target = $region13
    $region12: #{tpu_custom_call.1} parent=1 // pred_region
      _
    $region13: #{tpu_custom_call.1} parent=1 // pred_fallthru
      _
    // Predicated region
    $region14: #{tpu_custom_call.1} parent=1 // pred_check
      _
    $region15: #{tpu_custom_call.1} parent=1 // pred_check_branch
      %18 = sbr.rel (0) target = $region17
    $region16: #{tpu_custom_call.1} parent=1 // pred_region
      %20 = vsyncadd [#allocation3], 0
      %s21 = sshll.u32 %s3, 4
      %s22 = int_to_ptr.hbm [resolvable:$true] %s21
      %s23 = sshll.u32 [#allocation2], 4
      %s24 = int_to_ptr.vmem [resolvable:$true] %s23
      %29 = dma.hbm_to_vmem [thread:$0]  %s22, 2048, %s24, [#allocation3], 128, 128, 8
    $region17: #{tpu_custom_call.1} parent=1 // pred_fallthru
      _
    // Predicated region
    $region18: #{tpu_custom_call.1} parent=1 // pred_check
      _
    $region19: #{tpu_custom_call.1} parent=1 // pred_check_branch
      %31 = sbr.rel (0) target = $region21
    $region20: #{tpu_custom_call.1} parent=1 // pred_region
      _
    $region21: #{tpu_custom_call.1} parent=1 // pred_fallthru
      _
    // Predicated region
    $region22: #{tpu_custom_call.1} parent=1 // pred_check
      _
    $region23: #{tpu_custom_call.1} parent=1 // pred_check_branch
      %33 = sbr.rel (0) target = $region25
    $region24: #{tpu_custom_call.1} parent=1 // pred_region
      %35 = dma.done [#allocation3], 2048
    $region25: #{tpu_custom_call.1} parent=1 // pred_fallthru
      _
    %v36 = vld [vmem:[%s0] sm:$0xff]
    %v37 = vld [vmem:[%s0 + $0x8] sm:$0xff]
    %v38 = vld [vmem:[%s0 + $0x10] sm:$0xff]
    %v39 = vld [vmem:[%s0 + $0x18] sm:$0xff]
    %v40 = vld [vmem:[%s0 + $0x20] sm:$0xff]
    %v41 = vld [vmem:[%s0 + $0x28] sm:$0xff]
    %v42 = vld [vmem:[%s1] sm:$0xff]
    %v43 = vld [vmem:[%s1 + $0x8] sm:$0xff]
    %v44 = vld [vmem:[%s1 + $0x10] sm:$0x7f]
    %v45 = vld [vmem:[%s2] sm:$0x1]
    %v47 = vperm.slane %v45, 0
    %vm49 = vcmask 187392
    %v51 = vsel %vm49, %v36, 0
    %v54 = vsel %vm49, %v37, 0
    %v57 = vsel %vm49, %v38, 0
    %v60 = vsel %vm49, %v39, 0
    %v63 = vsel %vm49, %v40, 0
    %v66 = vsel %vm49, %v41, 0
    %vm68 = vcmask 1046528
    %v70 = vsel %vm68, %v44, 0
    %72 = vmatpush.msra.mxu0 0.0
    %73 = vmatpush.msra.mxu0 0.0
    %74 = vmatpush.msra.mxu0 0.0
    %75 = vmatpush.msra.mxu0 0.0
    %76 = vmatpush.msra.mxu0 0.0
    %77 = vmatpush.msra.mxu0 0.0
    %78 = vmatpush.msra.mxu0 0.0
    %79 = vmatpush.msra.mxu0 0.0
    %80 = vmatpush.msra.mxu0 0.0
    %81 = vmatpush.msra.mxu0 0.0
    %82 = vmatpush.msra.mxu0 0.0
    %83 = vmatpush.msra.mxu0 0.0
    %84 = vmatpush.msra.mxu0 0.0
    %85 = vmatpush.msra.mxu0 %v70
    %86 = vmatpush.msra.mxu0 %v43
    %87 = vmatpush.msra.mxu0 %v42
    %88 = vmatmul.f32.gmra.mxu0 %v51
    %v89 = vpop.f32.mrf.mxu0
    %v90 = vadd.f32 %v47, %v89
    %91 = vmatmul.f32.gmra.mxu0 %v54
    %v92 = vpop.f32.mrf.mxu0
    %v93 = vadd.f32 %v47, %v92
    %94 = vmatmul.f32.gmra.mxu0 %v57
    %v95 = vpop.f32.mrf.mxu0
    %v96 = vadd.f32 %v47, %v95
    %97 = vmatmul.f32.gmra.mxu0 %v60
    %v98 = vpop.f32.mrf.mxu0
    %v99 = vadd.f32 %v47, %v98
    %100 = vmatmul.f32.gmra.mxu0 %v63
    %v101 = vpop.f32.mrf.mxu0
    %v102 = vadd.f32 %v47, %v101
    %103 = vmatmul.f32.gmra.mxu0 %v66
    %v104 = vpop.f32.mrf.mxu0
    %v105 = vadd.f32 %v47, %v104
    %106 = vdwg.mxu0
    %v107 = vmax.f32 %v90, 0.0
    %v108 = vmax.f32 %v93, 0.0
    %v109 = vmax.f32 %v96, 0.0
    %v110 = vmax.f32 %v99, 0.0
    %v111 = vmax.f32 %v102, 0.0
    %v112 = vmax.f32 %v105, 0.0
    %v113 = vld [vmem:[#allocation2] sm:$0xff]
    %v114 = vld [vmem:[#allocation2 + $0x8] sm:$0xff]
    %v115 = vld [vmem:[#allocation2 + $0x10] sm:$0xff]
    %v116 = vld [vmem:[#allocation2 + $0x18] sm:$0xff]
    %v117 = vld [vmem:[#allocation2 + $0x20] sm:$0xff]
    %v118 = vld [vmem:[#allocation2 + $0x28] sm:$0xff]
    %v119 = vld [vmem:[#allocation2 + $0x30] sm:$0xff]
    %v120 = vld [vmem:[#allocation2 + $0x38] sm:$0xff]
    %v121 = vld [vmem:[#allocation2 + $0x40] sm:$0xff]
    %v122 = vld [vmem:[#allocation2 + $0x48] sm:$0xff]
    %v123 = vld [vmem:[#allocation2 + $0x50] sm:$0xff]
    %v124 = vld [vmem:[#allocation2 + $0x58] sm:$0xff]
    %v125 = vld [vmem:[#allocation2 + $0x60] sm:$0xff]
    %v126 = vld [vmem:[#allocation2 + $0x68] sm:$0xff]
    %v127 = vld [vmem:[#allocation2 + $0x70] sm:$0xff]
    %v128 = vld [vmem:[#allocation2 + $0x78] sm:$0xff]
    %v129 = vld [vmem:[%s4] sm:$0x1]
    %v131 = vperm.slane %v129, 0
    %133 = vmatpush.msra.mxu0 %v128
    %134 = vmatpush.msra.mxu0 %v127
    %135 = vmatpush.msra.mxu0 %v126
    %136 = vmatpush.msra.mxu0 %v125
    %137 = vmatpush.msra.mxu0 %v124
    %138 = vmatpush.msra.mxu0 %v123
    %139 = vmatpush.msra.mxu0 %v122
    %140 = vmatpush.msra.mxu0 %v121
    %141 = vmatpush.msra.mxu0 %v120
    %142 = vmatpush.msra.mxu0 %v119
    %143 = vmatpush.msra.mxu0 %v118
    %144 = vmatpush.msra.mxu0 %v117
    %145 = vmatpush.msra.mxu0 %v116
    %146 = vmatpush.msra.mxu0 %v115
    %147 = vmatpush.msra.mxu0 %v114
    %148 = vmatpush.msra.mxu0 %v113
    %149 = vmatmul.f32.gmra.mxu0 %v107
    %v150 = vpop.f32.mrf.mxu0
    %v151 = vadd.f32 %v131, %v150
    %152 = vmatmul.f32.gmra.mxu0 %v108
    %v153 = vpop.f32.mrf.mxu0
    %v154 = vadd.f32 %v131, %v153
    %155 = vmatmul.f32.gmra.mxu0 %v109
    %v156 = vpop.f32.mrf.mxu0
    %v157 = vadd.f32 %v131, %v156
    %158 = vmatmul.f32.gmra.mxu0 %v110
    %v159 = vpop.f32.mrf.mxu0
    %v160 = vadd.f32 %v131, %v159
    %161 = vmatmul.f32.gmra.mxu0 %v111
    %v162 = vpop.f32.mrf.mxu0
    %v163 = vadd.f32 %v131, %v162
    %164 = vmatmul.f32.gmra.mxu0 %v112
    %v165 = vpop.f32.mrf.mxu0
    %v166 = vadd.f32 %v131, %v165
    %167 = vdwg.mxu0
    %vm168 = vcmask 15360
    %169 = vst.msk [vmem:[%s5] sm:$0xff] %vm168, %v151
    %170 = vst.msk [vmem:[%s5 + $0x8] sm:$0xff] %vm168, %v154
    %171 = vst.msk [vmem:[%s5 + $0x10] sm:$0xff] %vm168, %v157
    %172 = vst.msk [vmem:[%s5 + $0x18] sm:$0xff] %vm168, %v160
    %173 = vst.msk [vmem:[%s5 + $0x20] sm:$0xff] %vm168, %v163
    %174 = vst.msk [vmem:[%s5 + $0x28] sm:$0xff] %vm168, %v166
    // Predicated region
    $region26: #{tpu_custom_call.1} parent=1 // pred_check
      _
    $region27: #{tpu_custom_call.1} parent=1 // pred_check_branch
      %176 = sbr.rel (0) target = $region29
    $region28: #{tpu_custom_call.1} parent=1 // pred_region
      _
    $region29: #{tpu_custom_call.1} parent=1 // pred_fallthru
      _
    // Predicated region
    $region30: #{tpu_custom_call.1} parent=1 // pred_check
      _
    $region31: #{tpu_custom_call.1} parent=1 // pred_check_branch
      %178 = sbr.rel (0) target = $region33
    $region32: #{tpu_custom_call.1} parent=1 // pred_region
      _
    $region33: #{tpu_custom_call.1} parent=1 // pred_fallthru
      _
    %179 = vsyncpa [#allocation3], 1

</llo_original>
